<compile_context>
chip_gen: v7x
topology: tpu7x:2x2x1
jax: 0.10.0
libtpu: 0.0.40
codegen_flags: <defaults>
</compile_context>

<pallas_src>
import jax
import jax.numpy as jnp
from jax.experimental import pallas as pl
from jax.experimental.pallas import tpu as pltpu

IN_FEATURES = 28 * 28   # 784
HIDDEN = 128
OUT_FEATURES = 10
TB_MAX = 2048           # max batch tile (rows)


def _cdiv(a, b):
    return (a + b - 1) // b


def _round_up(n, m):
    return _cdiv(n, m) * m


def mlp_kernel(x_ref, w1_ref, b1_ref, w2_ref, b2_ref, o_ref):
    # x arrives as f32 from HBM; cast to bf16 in-kernel (hidden under the DMA).
    x = x_ref[...].astype(jnp.bfloat16)
    # fc1: [TB, 784] bf16 @ [784, 128] bf16 -> f32 accumulate on the MXU.
    h = jnp.dot(x, w1_ref[...], preferred_element_type=jnp.float32)
    h = jnp.maximum(h + b1_ref[...], 0.0)
    # fc2: [TB, 128] bf16 @ [128, 10] bf16 -> f32 accumulate on the MXU.
    out = jnp.dot(h.astype(jnp.bfloat16), w2_ref[...],
                  preferred_element_type=jnp.float32)
    o_ref[...] = (out + b2_ref[...]).astype(o_ref.dtype)


def prepare_params(w1, b1, w2, b2):
    """One-time, per-model weight prep (hoisted out of the forward pass).

    w1: [784, 128], b1: [128], w2: [128, 10], b2: [10]  (all f32, [in, out]).
    """
    return (
        w1.astype(jnp.bfloat16),                    # [784, 128] bf16, MXU operand
        b1.reshape(1, HIDDEN).astype(jnp.float32),  # [1, 128] f32
        w2.astype(jnp.bfloat16),                    # [128, 10] bf16, MXU operand
        b2.reshape(1, OUT_FEATURES).astype(jnp.float32),  # [1, 10] f32
    )


def neuralnet_forward(x, prepared_params, *, tb_max=TB_MAX):
    """x: [B, 1, 28, 28] (or anything flattenable to [-1, 784]), float32."""
    w1_bf16, b1_2d, w2_bf16, b2_2d = prepared_params

    x2d = x.reshape(-1, IN_FEATURES).astype(jnp.float32)
    batch = x2d.shape[0]

    # Grid-step count: enough steps to respect tb_max; >= 2 steps once the batch
    # is big enough to matter so v7x's 2 TensorCores both get work.
    n_steps = _cdiv(batch, tb_max)
    if batch > tb_max // 2:
        n_steps = max(n_steps, 2)
    # Tile rounded to 16 rows (bf16 sublane packing); minimal tail padding.
    tb = _round_up(_cdiv(batch, n_steps), 16)
    padded_batch = n_steps * tb
    if padded_batch != batch:
        x2d = jnp.pad(x2d, ((0, padded_batch - batch), (0, 0)))

    flops = 2 * padded_batch * IN_FEATURES * HIDDEN + 2 * padded_batch * HIDDEN * OUT_FEATURES
    bytes_accessed = (
        padded_batch * IN_FEATURES * 4          # x (f32, dominant stream)
        + IN_FEATURES * HIDDEN * 2              # w1 (bf16)
        + HIDDEN * OUT_FEATURES * 2             # w2 (bf16)
        + HIDDEN * 4 + OUT_FEATURES * 4         # biases
        + padded_batch * OUT_FEATURES * 4       # output (f32, narrow)
    )

    out = pl.pallas_call(
        mlp_kernel,
        out_shape=jax.ShapeDtypeStruct((padded_batch, OUT_FEATURES), jnp.float32),
        grid=(n_steps,),
        in_specs=[
            pl.BlockSpec((tb, IN_FEATURES), lambda i: (i, 0)),        # x: streamed per tile
            pl.BlockSpec((IN_FEATURES, HIDDEN), lambda i: (0, 0)),    # w1: resident
            pl.BlockSpec((1, HIDDEN), lambda i: (0, 0)),              # b1: resident
            pl.BlockSpec((HIDDEN, OUT_FEATURES), lambda i: (0, 0)),   # w2: resident
            pl.BlockSpec((1, OUT_FEATURES), lambda i: (0, 0)),        # b2: resident
        ],
        out_specs=pl.BlockSpec((tb, OUT_FEATURES), lambda i: (i, 0)),
        compiler_params=pltpu.CompilerParams(
            dimension_semantics=("parallel",),
            vmem_limit_bytes=32 << 20,
        ),
        cost_estimate=pl.CostEstimate(
            flops=flops, transcendentals=0, bytes_accessed=bytes_accessed),
    )(x2d, w1_bf16, b1_2d, w2_bf16, b2_2d)

    if padded_batch != batch:
        out = out[:batch]
    return out


def init_params(key):
    """Deterministic init mimicking nn.Linear's U(-1/sqrt(fan_in), 1/sqrt(fan_in))."""
    k1, k2, k3, k4 = jax.random.split(key, 4)
    bound1 = 1.0 / jnp.sqrt(jnp.float32(IN_FEATURES))
    bound2 = 1.0 / jnp.sqrt(jnp.float32(HIDDEN))
    # Stored as [in, out] (transpose of PyTorch's [out, in]).
    w1 = jax.random.uniform(k1, (IN_FEATURES, HIDDEN), jnp.float32, -bound1, bound1)
    b1 = jax.random.uniform(k2, (HIDDEN,), jnp.float32, -bound1, bound1)
    w2 = jax.random.uniform(k3, (HIDDEN, OUT_FEATURES), jnp.float32, -bound2, bound2)
    b2 = jax.random.uniform(k4, (OUT_FEATURES,), jnp.float32, -bound2, bound2)
    return w1, b1, w2, b2


if __name__ == "__main__":
    key = jax.random.PRNGKey(0)
    kx, kp = jax.random.split(key)

    # Small MNIST-like batch: [B=8, C=1, H=28, W=28]
    x = jax.random.normal(kx, (8, 1, 28, 28), jnp.float32)
    w1, b1, w2, b2 = init_params(kp)
    prepared = prepare_params(w1, b1, w2, b2)

    out = neuralnet_forward(x, prepared)
    out = jax.block_until_ready(out)
    assert out.shape == (8, OUT_FEATURES)

    # Pure-JAX reference with the same bf16-matmul / f32-accumulate semantics.
    x2d = x.reshape(-1, IN_FEATURES)
    h_ref = jnp.maximum(
        jnp.dot(x2d.astype(jnp.bfloat16), w1.astype(jnp.bfloat16),
                preferred_element_type=jnp.float32) + b1, 0.0)
    ref = jnp.dot(h_ref.astype(jnp.bfloat16), w2.astype(jnp.bfloat16),
                  preferred_element_type=jnp.float32) + b2
    assert jnp.allclose(out, ref, atol=2e-2, rtol=2e-2), (
        f"max abs err = {jnp.max(jnp.abs(out - ref))}")

    # Sanity vs. full-f32 math (loose: bf16 matmuls introduce ~1e-2 noise).
    ref_f32 = jnp.maximum(x2d @ w1 + b1, 0.0) @ w2 + b2
    assert jnp.allclose(out, ref_f32, atol=1e-1, rtol=1e-1), (
        f"max abs err vs f32 = {jnp.max(jnp.abs(out - ref_f32))}")

    print("KERNEL_OK")
</pallas_src>

<mosaic_0001>
module attributes {stable_mosaic.version = 11 : i64} {
  func.func @mlp_kernel(%arg0: i32, %arg1: memref<16x784xf32, #tpu.memory_space<vmem>>, %arg2: memref<784x128xbf16, #tpu.memory_space<vmem>>, %arg3: memref<1x128xf32, #tpu.memory_space<vmem>>, %arg4: memref<128x10xbf16, #tpu.memory_space<vmem>>, %arg5: memref<1x10xf32, #tpu.memory_space<vmem>>, %arg6: memref<16x10xf32, #tpu.memory_space<vmem>>) attributes {dimension_semantics = [#tpu.dimension_semantics<parallel>], iteration_bounds = array<i64: 1>, scalar_prefetch = 0 : i64, scratch_operands = 0 : i64, tpu.core_type = #tpu.core_type<tc>, window_params = [{transform_indices = @transform_0, window_bounds = array<i64: 16, 784>}, {pipeline_mode = #tpu.pipeline_mode<synchronous>, transform_indices = @transform_1, window_bounds = array<i64: 784, 128>}, {pipeline_mode = #tpu.pipeline_mode<synchronous>, transform_indices = @transform_2, window_bounds = array<i64: 1, 128>}, {pipeline_mode = #tpu.pipeline_mode<synchronous>, transform_indices = @transform_3, window_bounds = array<i64: 128, 10>}, {pipeline_mode = #tpu.pipeline_mode<synchronous>, transform_indices = @transform_4, window_bounds = array<i64: 1, 10>}, {transform_indices = @transform_5, window_bounds = array<i64: 16, 10>}]} {
    %c0 = arith.constant 0 : index
    %c0_0 = arith.constant 0 : index
    %0 = vector.load %arg1[%c0, %c0_0] : memref<16x784xf32, #tpu.memory_space<vmem>>, vector<16x784xf32>
    %1 = arith.truncf %0 : vector<16x784xf32> to vector<16x784xbf16>
    %c0_1 = arith.constant 0 : index
    %c0_2 = arith.constant 0 : index
    %2 = vector.load %arg2[%c0_1, %c0_2] : memref<784x128xbf16, #tpu.memory_space<vmem>>, vector<784x128xbf16>
    %cst = arith.constant dense<0.000000e+00> : vector<16x128xf32>
    %3 = tpu.matmul %1, %2, %cst {dimension_numbers = #tpu.dot_dimension_numbers<[1], [0], [0], [1], [0, 0, 1, 1], [], []>} : vector<16x784xbf16>, vector<784x128xbf16>, vector<16x128xf32> -> vector<16x128xf32>
    %c0_3 = arith.constant 0 : index
    %c0_4 = arith.constant 0 : index
    %4 = vector.load %arg3[%c0_3, %c0_4] : memref<1x128xf32, #tpu.memory_space<vmem>>, vector<1x128xf32>
    %5 = vector.broadcast %4 : vector<1x128xf32> to vector<16x128xf32>
    %6 = arith.addf %3, %5 : vector<16x128xf32>
    %cst_5 = arith.constant 0.000000e+00 : f32
    %7 = vector.broadcast %cst_5 : f32 to vector<16x128xf32>
    %8 = arith.maximumf %6, %7 : vector<16x128xf32>
    %9 = arith.truncf %8 : vector<16x128xf32> to vector<16x128xbf16>
    %c0_6 = arith.constant 0 : index
    %c0_7 = arith.constant 0 : index
    %10 = vector.load %arg4[%c0_6, %c0_7] : memref<128x10xbf16, #tpu.memory_space<vmem>>, vector<128x10xbf16>
    %cst_8 = arith.constant dense<0.000000e+00> : vector<16x10xf32>
    %11 = tpu.matmul %9, %10, %cst_8 {dimension_numbers = #tpu.dot_dimension_numbers<[1], [0], [0], [1], [0, 0, 1, 1], [], []>} : vector<16x128xbf16>, vector<128x10xbf16>, vector<16x10xf32> -> vector<16x10xf32>
    %c0_9 = arith.constant 0 : index
    %c0_10 = arith.constant 0 : index
    %12 = vector.load %arg5[%c0_9, %c0_10] : memref<1x10xf32, #tpu.memory_space<vmem>>, vector<1x10xf32>
    %13 = vector.broadcast %12 : vector<1x10xf32> to vector<16x10xf32>
    %14 = arith.addf %11, %13 : vector<16x10xf32>
    %c0_11 = arith.constant 0 : index
    %c0_12 = arith.constant 0 : index
    %15 = vector.load %arg6[%c0_11, %c0_12] : memref<16x10xf32, #tpu.memory_space<vmem>>, vector<16x10xf32>
    tpu.vector_store %arg6[%c0_11, %c0_12], %14 {strides = array<i32>} : memref<16x10xf32, #tpu.memory_space<vmem>>, vector<16x10xf32>,
    return
  }
  func.func @transform_0(%arg0: i32) -> (i32, i32) {
    %c0_i32 = arith.constant 0 : i32
    %c0_i32_0 = arith.constant 0 : i32
    return %arg0, %c0_i32 : i32, i32
  }
  func.func @transform_1(%arg0: i32) -> (i32, i32) {
    %c0_i32 = arith.constant 0 : i32
    %c0_i32_0 = arith.constant 0 : i32
    %c0_i32_1 = arith.constant 0 : i32
    return %c0_i32, %c0_i32_0 : i32, i32
  }
  func.func @transform_2(%arg0: i32) -> (i32, i32) {
    %c0_i32 = arith.constant 0 : i32
    %c0_i32_0 = arith.constant 0 : i32
    %c0_i32_1 = arith.constant 0 : i32
    return %c0_i32, %c0_i32_0 : i32, i32
  }
  func.func @transform_3(%arg0: i32) -> (i32, i32) {
    %c0_i32 = arith.constant 0 : i32
    %c0_i32_0 = arith.constant 0 : i32
    %c0_i32_1 = arith.constant 0 : i32
    return %c0_i32, %c0_i32_0 : i32, i32
  }
  func.func @transform_4(%arg0: i32) -> (i32, i32) {
    %c0_i32 = arith.constant 0 : i32
    %c0_i32_0 = arith.constant 0 : i32
    %c0_i32_1 = arith.constant 0 : i32
    return %c0_i32, %c0_i32_0 : i32, i32
  }
  func.func @transform_5(%arg0: i32) -> (i32, i32) {
    %c0_i32 = arith.constant 0 : i32
    %c0_i32_0 = arith.constant 0 : i32
    return %arg0, %c0_i32 : i32, i32
  }
}

</mosaic_0001>

<llo_original>
// kernel: tpu_custom_call.1
$region0: #{tpu_custom_call.1}
  #allocation0 [shape = 'u32[]', space=smem, size = 0x4, offset = 0x4, fixed_abs, tag = 'smem constant byte address 0x4 - core index']
  #allocation1 [shape = 'u32[144,128]{1,0:T(1,128)}', space=vmem, size = 0x12000, scoped, tag = 'internal scratch']
  %s0 = inlined_call_operand.hbm [shape: f32[16,784], index: 0, kind: input, shape index: {}]
  %s1 = inlined_call_operand.hbm [shape: bf16[784,128], index: 1, kind: input, shape index: {}]
  %s2 = inlined_call_operand.vmem [shape: f32[1,128], index: 2, kind: input, shape index: {}]
  %s3 = inlined_call_operand.vmem [shape: bf16[128,10], index: 3, kind: input, shape index: {}]
  %s4 = inlined_call_operand.vmem [shape: f32[1,10], index: 4, kind: input, shape index: {}]
  %s5 = inlined_call_operand.hbm [shape: f32[16,10], index: 5, kind: output, shape index: {}]
  %s6 = sld [smem:[#allocation0]]
  $region38: #{tpu_custom_call.1} parent=0
    _
  %s8 = ssub.s32 1, %s6
  %s9 = scalar_select 0, %s8, %s6
  $region1: #{tpu_custom_call.1} parent=0
    #allocation2 [shape = 'u8[57344]{0}', space=vmem, size = 0xe000, scoped, tag = 'input window, operand 0, single buffered']
    #allocation3 [shape = 's32[1]{0}', space=sflag, size = 0x4, scoped, tag = 'scoped memory for tpu_custom_call.1']
    #allocation4 [shape = 's32[1]{0}', space=sflag, size = 0x4, scoped, tag = 'scoped memory for tpu_custom_call.1']
    #allocation5 [shape = 'u8[200704]{0}', space=vmem, size = 0x31000, scoped, tag = 'input window, operand 1, single buffered']
    #allocation6 [shape = 's32[1]{0}', space=sflag, size = 0x4, scoped, tag = 'scoped memory for tpu_custom_call.1']
    #allocation7 [shape = 'u8[8192]{0}', space=vmem, size = 0x2000, scoped, tag = 'output window, operand 0, single buffered']
    %10 = vsyncpa [#allocation3], 0
    %11 = vsyncpa [#allocation6], 0
    %12 = vsyncpa [#allocation4], 0
    // Predicated region
    $region2: #{tpu_custom_call.1} parent=1 // pred_check
      _
    $region3: #{tpu_custom_call.1} parent=1 // pred_check_branch
      %14 = sbr.rel (0) target = $region5
    $region4: #{tpu_custom_call.1} parent=1 // pred_region
      %s16 = ssub.s32 1792, 1792
      %17 = vsyncadd [#allocation3], %s16
      %s18 = sshll.u32 [#allocation2], 4
      %s19 = int_to_ptr.vmem [resolvable:$true] %s18
      %24 = dma.hbm_to_vmem [thread:$0]  %s0, 1792, %s19, [#allocation3], 896, 896, 56
    $region5: #{tpu_custom_call.1} parent=1 // pred_fallthru
      _
    // Predicated region
    $region6: #{tpu_custom_call.1} parent=1 // pred_check
      _
    $region7: #{tpu_custom_call.1} parent=1 // pred_check_branch
      %26 = sbr.rel (0) target = $region9
    $region8: #{tpu_custom_call.1} parent=1 // pred_region
      %s28 = ssub.s32 6272, 6272
      %29 = vsyncadd [#allocation6], %s28
      %s30 = sshll.u32 [#allocation5], 4
      %s31 = int_to_ptr.vmem [resolvable:$true] %s30
      %36 = dma.hbm_to_vmem [thread:$0]  %s1, 6272, %s31, [#allocation6], 64, 64, 4
    $region9: #{tpu_custom_call.1} parent=1 // pred_fallthru
      _
    // Predicated region
    $region10: #{tpu_custom_call.1} parent=1 // pred_check
      _
    $region11: #{tpu_custom_call.1} parent=1 // pred_check_branch
      %38 = sbr.rel (0) target = $region13
    $region12: #{tpu_custom_call.1} parent=1 // pred_region
      _
    $region13: #{tpu_custom_call.1} parent=1 // pred_fallthru
      _
    // Predicated region
    $region14: #{tpu_custom_call.1} parent=1 // pred_check
      _
    $region15: #{tpu_custom_call.1} parent=1 // pred_check_branch
      %40 = sbr.rel (0) target = $region17
    $region16: #{tpu_custom_call.1} parent=1 // pred_region
      _
    $region17: #{tpu_custom_call.1} parent=1 // pred_fallthru
      _
    // Predicated region
    $region18: #{tpu_custom_call.1} parent=1 // pred_check
      _
    $region19: #{tpu_custom_call.1} parent=1 // pred_check_branch
      %42 = sbr.rel (0) target = $region21
    $region20: #{tpu_custom_call.1} parent=1 // pred_region
      _
    $region21: #{tpu_custom_call.1} parent=1 // pred_fallthru
      _
    // Predicated region
    $region22: #{tpu_custom_call.1} parent=1 // pred_check
      _
    $region23: #{tpu_custom_call.1} parent=1 // pred_check_branch
      %44 = sbr.rel (0) target = $region25
    $region24: #{tpu_custom_call.1} parent=1 // pred_region
      %45 = dma.done [#allocation3], 1792
    $region25: #{tpu_custom_call.1} parent=1 // pred_fallthru
      _
    // Predicated region
    $region26: #{tpu_custom_call.1} parent=1 // pred_check
      _
    $region27: #{tpu_custom_call.1} parent=1 // pred_check_branch
      %47 = sbr.rel (0) target = $region29
    $region28: #{tpu_custom_call.1} parent=1 // pred_region
      %48 = dma.done [#allocation6], 6272
    $region29: #{tpu_custom_call.1} parent=1 // pred_fallthru
      _
    %v50 = vld [vmem:[#allocation2] sm:$0xff]
    %v51 = vld [vmem:[#allocation2 + $0x8] sm:$0xff]
    %v52 = vld [vmem:[#allocation2 + $0x10] sm:$0xff]
    %v53 = vld [vmem:[#allocation2 + $0x18] sm:$0xff]
    %v54 = vld [vmem:[#allocation2 + $0x20] sm:$0xff]
    %v55 = vld [vmem:[#allocation2 + $0x28] sm:$0xff]
    %v56 = vld [vmem:[#allocation2 + $0x30] sm:$0xff]
    %v57 = vld [vmem:[#allocation2 + $0x38] sm:$0xff]
    %v58 = vld [vmem:[#allocation2 + $0x40] sm:$0xff]
    %v59 = vld [vmem:[#allocation2 + $0x48] sm:$0xff]
    %v60 = vld [vmem:[#allocation2 + $0x50] sm:$0xff]
    %v61 = vld [vmem:[#allocation2 + $0x58] sm:$0xff]
    %v62 = vld [vmem:[#allocation2 + $0x60] sm:$0xff]
    %v63 = vld [vmem:[#allocation2 + $0x68] sm:$0xff]
    %v64 = vpack.c.bf16 %v57, %v50
    %v65 = vpack.c.bf16 %v58, %v51
    %v66 = vpack.c.bf16 %v59, %v52
    %v67 = vpack.c.bf16 %v60, %v53
    %v68 = vpack.c.bf16 %v61, %v54
    %v69 = vpack.c.bf16 %v62, %v55
    %v70 = vpack.c.bf16 %v63, %v56
    %v71 = vld [vmem:[#allocation5] sm:$0xf]
    %v72 = vld [vmem:[#allocation5 + $0x4] sm:$0xf]
    %v73 = vld [vmem:[#allocation5 + $0x8] sm:$0xf]
    %v74 = vld [vmem:[#allocation5 + $0xc] sm:$0xf]
    %v75 = vld [vmem:[#allocation5 + $0x10] sm:$0xf]
    %v76 = vld [vmem:[#allocation5 + $0x14] sm:$0xf]
    %v77 = vld [vmem:[#allocation5 + $0x18] sm:$0xf]
    %v78 = vld [vmem:[#allocation5 + $0x1c] sm:$0xf]
    %v79 = vld [vmem:[#allocation5 + $0x20] sm:$0xf]
    %v80 = vld [vmem:[#allocation5 + $0x24] sm:$0xf]
    %v81 = vld [vmem:[#allocation5 + $0x28] sm:$0xf]
    %v82 = vld [vmem:[#allocation5 + $0x2c] sm:$0xf]
    %v83 = vld [vmem:[#allocation5 + $0x30] sm:$0xf]
    %v84 = vld [vmem:[#allocation5 + $0x34] sm:$0xf]
    %v85 = vld [vmem:[#allocation5 + $0x38] sm:$0xf]
    %v86 = vld [vmem:[#allocation5 + $0x3c] sm:$0xf]
    %v87 = vld [vmem:[#allocation5 + $0x40] sm:$0xf]
    %v88 = vld [vmem:[#allocation5 + $0x44] sm:$0xf]
    %v89 = vld [vmem:[#allocation5 + $0x48] sm:$0xf]
    %v90 = vld [vmem:[#allocation5 + $0x4c] sm:$0xf]
    %v91 = vld [vmem:[#allocation5 + $0x50] sm:$0xf]
    %v92 = vld [vmem:[#allocation5 + $0x54] sm:$0xf]
    %v93 = vld [vmem:[#allocation5 + $0x58] sm:$0xf]
    %v94 = vld [vmem:[#allocation5 + $0x5c] sm:$0xf]
    %v95 = vld [vmem:[#allocation5 + $0x60] sm:$0xf]
    %v96 = vld [vmem:[#allocation5 + $0x64] sm:$0xf]
    %v97 = vld [vmem:[#allocation5 + $0x68] sm:$0xf]
    %v98 = vld [vmem:[#allocation5 + $0x6c] sm:$0xf]
    %v99 = vld [vmem:[#allocation5 + $0x70] sm:$0xf]
    %v100 = vld [vmem:[#allocation5 + $0x74] sm:$0xf]
    %v101 = vld [vmem:[#allocation5 + $0x78] sm:$0xf]
    %v102 = vld [vmem:[#allocation5 + $0x7c] sm:$0xf]
    %v103 = vld [vmem:[#allocation5 + $0x80] sm:$0xf]
    %v104 = vld [vmem:[#allocation5 + $0x84] sm:$0xf]
    %v105 = vld [vmem:[#allocation5 + $0x88] sm:$0xf]
    %v106 = vld [vmem:[#allocation5 + $0x8c] sm:$0xf]
    %v107 = vld [vmem:[#allocation5 + $0x90] sm:$0xf]
    %v108 = vld [vmem:[#allocation5 + $0x94] sm:$0xf]
    %v109 = vld [vmem:[#allocation5 + $0x98] sm:$0xf]
    %v110 = vld [vmem:[#allocation5 + $0x9c] sm:$0xf]
    %v111 = vld [vmem:[#allocation5 + $0xa0] sm:$0xf]
    %v112 = vld [vmem:[#allocation5 + $0xa4] sm:$0xf]
    %v113 = vld [vmem:[#allocation5 + $0xa8] sm:$0xf]
    %v114 = vld [vmem:[#allocation5 + $0xac] sm:$0xf]
    %v115 = vld [vmem:[#allocation5 + $0xb0] sm:$0xf]
    %v116 = vld [vmem:[#allocation5 + $0xb4] sm:$0xf]
    %v117 = vld [vmem:[#allocation5 + $0xb8] sm:$0xf]
    %v118 = vld [vmem:[#allocation5 + $0xbc] sm:$0xf]
    %v119 = vld [vmem:[#allocation5 + $0xc0] sm:$0xf]
    %v120 = vld [vmem:[#allocation5 + $0xc4] sm:$0xf]
    %v121 = vld [vmem:[#allocation5 + $0xc8] sm:$0xf]
    %v122 = vld [vmem:[#allocation5 + $0xcc] sm:$0xf]
    %v123 = vld [vmem:[#allocation5 + $0xd0] sm:$0xf]
    %v124 = vld [vmem:[#allocation5 + $0xd4] sm:$0xf]
    %v125 = vld [vmem:[#allocation5 + $0xd8] sm:$0xf]
    %v126 = vld [vmem:[#allocation5 + $0xdc] sm:$0xf]
    %v127 = vld [vmem:[#allocation5 + $0xe0] sm:$0xf]
    %v128 = vld [vmem:[#allocation5 + $0xe4] sm:$0xf]
    %v129 = vld [vmem:[#allocation5 + $0xe8] sm:$0xf]
    %v130 = vld [vmem:[#allocation5 + $0xec] sm:$0xf]
    %v131 = vld [vmem:[#allocation5 + $0xf0] sm:$0xf]
    %v132 = vld [vmem:[#allocation5 + $0xf4] sm:$0xf]
    %v133 = vld [vmem:[#allocation5 + $0xf8] sm:$0xf]
    %v134 = vld [vmem:[#allocation5 + $0xfc] sm:$0xf]
    %v135 = vld [vmem:[#allocation5 + $0x100] sm:$0xf]
    %v136 = vld [vmem:[#allocation5 + $0x104] sm:$0xf]
    %v137 = vld [vmem:[#allocation5 + $0x108] sm:$0xf]
    %v138 = vld [vmem:[#allocation5 + $0x10c] sm:$0xf]
    %v139 = vld [vmem:[#allocation5 + $0x110] sm:$0xf]
    %v140 = vld [vmem:[#allocation5 + $0x114] sm:$0xf]
    %v141 = vld [vmem:[#allocation5 + $0x118] sm:$0xf]
    %v142 = vld [vmem:[#allocation5 + $0x11c] sm:$0xf]
    %v143 = vld [vmem:[#allocation5 + $0x120] sm:$0xf]
    %v144 = vld [vmem:[#allocation5 + $0x124] sm:$0xf]
    %v145 = vld [vmem:[#allocation5 + $0x128] sm:$0xf]
    %v146 = vld [vmem:[#allocation5 + $0x12c] sm:$0xf]
    %v147 = vld [vmem:[#allocation5 + $0x130] sm:$0xf]
    %v148 = vld [vmem:[#allocation5 + $0x134] sm:$0xf]
    %v149 = vld [vmem:[#allocation5 + $0x138] sm:$0xf]
    %v150 = vld [vmem:[#allocation5 + $0x13c] sm:$0xf]
    %v151 = vld [vmem:[#allocation5 + $0x140] sm:$0xf]
    %v152 = vld [vmem:[#allocation5 + $0x144] sm:$0xf]
    %v153 = vld [vmem:[#allocation5 + $0x148] sm:$0xf]
    %v154 = vld [vmem:[#allocation5 + $0x14c] sm:$0xf]
    %v155 = vld [vmem:[#allocation5 + $0x150] sm:$0xf]
    %v156 = vld [vmem:[#allocation5 + $0x154] sm:$0xf]
    %v157 = vld [vmem:[#allocation5 + $0x158] sm:$0xf]
    %v158 = vld [vmem:[#allocation5 + $0x15c] sm:$0xf]
    %v159 = vld [vmem:[#allocation5 + $0x160] sm:$0xf]
    %v160 = vld [vmem:[#allocation5 + $0x164] sm:$0xf]
    %v161 = vld [vmem:[#allocation5 + $0x168] sm:$0xf]
    %v162 = vld [vmem:[#allocation5 + $0x16c] sm:$0xf]
    %v163 = vld [vmem:[#allocation5 + $0x170] sm:$0xf]
    %v164 = vld [vmem:[#allocation5 + $0x174] sm:$0xf]
    %v165 = vld [vmem:[#allocation5 + $0x178] sm:$0xf]
    %v166 = vld [vmem:[#allocation5 + $0x17c] sm:$0xf]
    %v167 = vld [vmem:[#allocation5 + $0x180] sm:$0xf]
    %v168 = vld [vmem:[#allocation5 + $0x184] sm:$0xf]
    %v169 = vld [vmem:[%s2] sm:$0x1]
    %v171 = vlaneseq
    %v172 = vshrl.u32 %v171, 7
    %v173 = vsub.s32 0, %v172
    %v174 = vrot.slane %v169, %v173
    %v274 = vunpack.c.l.b16 %v71
    %v275 = vunpack.c.l.b16 %v72
    %v276 = vunpack.c.l.b16 %v73
    %v277 = vunpack.c.l.b16 %v74
    %v278 = vunpack.c.l.b16 %v75
    %v279 = vunpack.c.l.b16 %v76
    %v280 = vunpack.c.l.b16 %v77
    %v281 = vunpack.c.l.b16 %v78
    %v282 = vunpack.c.l.b16 %v79
    %v283 = vunpack.c.l.b16 %v80
    %v284 = vunpack.c.l.b16 %v81
    %v285 = vunpack.c.l.b16 %v82
    %v286 = vunpack.c.l.b16 %v83
    %v287 = vunpack.c.l.b16 %v84
    %v288 = vunpack.c.l.b16 %v85
    %v289 = vunpack.c.l.b16 %v86
    %v290 = vunpack.c.l.b16 %v87
    %v291 = vunpack.c.l.b16 %v88
    %v292 = vunpack.c.l.b16 %v89
    %v293 = vunpack.c.l.b16 %v90
    %v294 = vunpack.c.l.b16 %v91
    %v295 = vunpack.c.l.b16 %v92
    %v296 = vunpack.c.l.b16 %v93
    %v297 = vunpack.c.l.b16 %v94
    %v298 = vunpack.c.l.b16 %v95
    %v299 = vunpack.c.l.b16 %v96
    %v300 = vunpack.c.l.b16 %v97
    %v301 = vunpack.c.l.b16 %v98
    %v302 = vunpack.c.l.b16 %v99
    %v303 = vunpack.c.l.b16 %v100
    %v304 = vunpack.c.l.b16 %v101
    %v305 = vunpack.c.l.b16 %v102
    %v306 = vunpack.c.l.b16 %v103
    %v307 = vunpack.c.l.b16 %v104
    %v308 = vunpack.c.l.b16 %v105
    %v309 = vunpack.c.l.b16 %v106
    %v310 = vunpack.c.l.b16 %v107
    %v311 = vunpack.c.l.b16 %v108
    %v312 = vunpack.c.l.b16 %v109
    %v313 = vunpack.c.l.b16 %v110
    %v314 = vunpack.c.l.b16 %v111
    %v315 = vunpack.c.l.b16 %v112
    %v316 = vunpack.c.l.b16 %v113
    %v317 = vunpack.c.l.b16 %v114
    %v318 = vunpack.c.l.b16 %v115
    %v319 = vunpack.c.l.b16 %v116
    %v320 = vunpack.c.l.b16 %v117
    %v321 = vunpack.c.l.b16 %v118
    %v322 = vunpack.c.l.b16 %v119
    %v323 = vunpack.c.l.b16 %v120
    %v324 = vunpack.c.l.b16 %v121
    %v325 = vunpack.c.l.b16 %v122
    %v326 = vunpack.c.l.b16 %v123
    %v327 = vunpack.c.l.b16 %v124
    %v328 = vunpack.c.l.b16 %v125
    %v329 = vunpack.c.l.b16 %v126
    %v330 = vunpack.c.l.b16 %v127
    %v331 = vunpack.c.l.b16 %v128
    %v332 = vunpack.c.l.b16 %v129
    %v333 = vunpack.c.l.b16 %v130
    %v334 = vunpack.c.l.b16 %v131
    %v335 = vunpack.c.l.b16 %v132
    %v336 = vunpack.c.l.b16 %v133
    %v337 = vunpack.c.l.b16 %v134
    %v338 = vunpack.c.l.b16 %v135
    %v339 = vunpack.c.l.b16 %v136
    %v340 = vunpack.c.l.b16 %v137
    %v341 = vunpack.c.l.b16 %v138
    %v342 = vunpack.c.l.b16 %v139
    %v343 = vunpack.c.l.b16 %v140
    %v344 = vunpack.c.l.b16 %v141
    %v345 = vunpack.c.l.b16 %v142
    %v346 = vunpack.c.l.b16 %v143
    %v347 = vunpack.c.l.b16 %v144
    %v348 = vunpack.c.l.b16 %v145
    %v349 = vunpack.c.l.b16 %v146
    %v350 = vunpack.c.l.b16 %v147
    %v351 = vunpack.c.l.b16 %v148
    %v352 = vunpack.c.l.b16 %v149
    %v353 = vunpack.c.l.b16 %v150
    %v354 = vunpack.c.l.b16 %v151
    %v355 = vunpack.c.l.b16 %v152
    %v356 = vunpack.c.l.b16 %v153
    %v357 = vunpack.c.l.b16 %v154
    %v358 = vunpack.c.l.b16 %v155
    %v359 = vunpack.c.l.b16 %v156
    %v360 = vunpack.c.l.b16 %v157
    %v361 = vunpack.c.l.b16 %v158
    %v362 = vunpack.c.l.b16 %v159
    %v363 = vunpack.c.l.b16 %v160
    %v364 = vunpack.c.l.b16 %v161
    %v365 = vunpack.c.l.b16 %v162
    %v366 = vunpack.c.l.b16 %v163
    %v367 = vunpack.c.l.b16 %v164
    %v368 = vunpack.c.l.b16 %v165
    %v369 = vunpack.c.l.b16 %v166
    %v370 = vunpack.c.l.b16 %v167
    %v371 = vunpack.c.l.b16 %v168
    %v372 = vpack.c.b16 %v275, %v274
    %v373 = vpack.c.b16 %v277, %v276
    %v374 = vpack.c.b16 %v279, %v278
    %v375 = vpack.c.b16 %v281, %v280
    %v376 = vpack.c.b16 %v283, %v282
    %v377 = vpack.c.b16 %v285, %v284
    %v378 = vpack.c.b16 %v287, %v286
    %v379 = vpack.c.b16 %v289, %v288
    %v380 = vpack.c.b16 %v291, %v290
    %v381 = vpack.c.b16 %v293, %v292
    %v382 = vpack.c.b16 %v295, %v294
    %v383 = vpack.c.b16 %v297, %v296
    %v384 = vpack.c.b16 %v299, %v298
    %v385 = vpack.c.b16 %v301, %v300
    %v386 = vpack.c.b16 %v303, %v302
    %v387 = vpack.c.b16 %v305, %v304
    %v388 = vpack.c.b16 %v307, %v306
    %v389 = vpack.c.b16 %v309, %v308
    %v390 = vpack.c.b16 %v311, %v310
    %v391 = vpack.c.b16 %v313, %v312
    %v392 = vpack.c.b16 %v315, %v314
    %v393 = vpack.c.b16 %v317, %v316
    %v394 = vpack.c.b16 %v319, %v318
    %v395 = vpack.c.b16 %v321, %v320
    %v396 = vpack.c.b16 %v323, %v322
    %v397 = vpack.c.b16 %v325, %v324
    %v398 = vpack.c.b16 %v327, %v326
    %v399 = vpack.c.b16 %v329, %v328
    %v400 = vpack.c.b16 %v331, %v330
    %v401 = vpack.c.b16 %v333, %v332
    %v402 = vpack.c.b16 %v335, %v334
    %v403 = vpack.c.b16 %v337, %v336
    %v404 = vpack.c.b16 %v339, %v338
    %v405 = vpack.c.b16 %v341, %v340
    %v406 = vpack.c.b16 %v343, %v342
    %v407 = vpack.c.b16 %v345, %v344
    %v408 = vpack.c.b16 %v347, %v346
    %v409 = vpack.c.b16 %v349, %v348
    %v410 = vpack.c.b16 %v351, %v350
    %v411 = vpack.c.b16 %v353, %v352
    %v412 = vpack.c.b16 %v355, %v354
    %v413 = vpack.c.b16 %v357, %v356
    %v414 = vpack.c.b16 %v359, %v358
    %v415 = vpack.c.b16 %v361, %v360
    %v416 = vpack.c.b16 %v363, %v362
    %v417 = vpack.c.b16 %v365, %v364
    %v418 = vpack.c.b16 %v367, %v366
    %v419 = vpack.c.b16 %v369, %v368
    %v420 = vpack.c.b16 %v371, %v370
    %vm470 = vcmask 130048
    %v472 = vsel %vm470, %v70, 0
    %474 = vmatprep.subr.bf16.mxu0 0
    %475 = vmatpush1.bf16.msra.mxu0 %v372
    %476 = vmatprep.subr.bf16.mxu0 0
    %477 = vmatpush1.bf16.msra.mxu0 %v373
    %478 = vmatprep.subr.bf16.mxu0 0
    %479 = vmatpush1.bf16.msra.mxu0 %v374
    %480 = vmatprep.subr.bf16.mxu0 0
    %481 = vmatpush1.bf16.msra.mxu0 %v375
    %482 = vmatprep.subr.bf16.mxu0 0
    %483 = vmatpush1.bf16.msra.mxu0 %v376
    %484 = vmatprep.subr.bf16.mxu0 0
    %485 = vmatpush1.bf16.msra.mxu0 %v377
    %486 = vmatprep.subr.bf16.mxu0 0
    %487 = vmatpush1.bf16.msra.mxu0 %v378
    %488 = vmatprep.subr.bf16.mxu0 0
    %489 = vmatpush1.bf16.msra.mxu0 %v379
    %490 = vmatprep.subr.bf16.mxu0 0
    %491 = vmatpush1.bf16.msra.mxu0 %v380
    %492 = vmatprep.subr.bf16.mxu0 0
    %493 = vmatpush1.bf16.msra.mxu0 %v381
    %494 = vmatprep.subr.bf16.mxu0 0
    %495 = vmatpush1.bf16.msra.mxu0 %v382
    %496 = vmatprep.subr.bf16.mxu0 0
    %497 = vmatpush1.bf16.msra.mxu0 %v383
    %498 = vmatprep.subr.bf16.mxu0 0
    %499 = vmatpush1.bf16.msra.mxu0 %v384
    %500 = vmatprep.subr.bf16.mxu0 0
    %501 = vmatpush1.bf16.msra.mxu0 %v385
    %502 = vmatprep.subr.bf16.mxu0 0
    %503 = vmatpush1.bf16.msra.mxu0 %v386
    %504 = vmatprep.subr.bf16.mxu0 0
    %505 = vmatpush1.bf16.msra.mxu0 %v387
    %506 = vmatprep.mubr.bf16.mxu0 %v65
    %507 = vmatmul.mubr.bf16.gmra.mrb[0].mxu0 %v64
    %v508 = vpop.f32.mrb[0].mxu0
    %v509 = vadd.f32 %v174, %v508
    %v510 = vpop.f32.mrb[0].mxu0
    %v511 = vpop.f32.mrb[0].mxu0
    %v512 = vadd.f32 %v174, %v511
    %v513 = vpop.f32.mrb[0].mxu0
    %514 = vdwg.mxu0
    %515 = vmatprep.subr.bf16.mxu0 0
    %516 = vmatpush1.bf16.msra.mxu0 %v388
    %517 = vmatprep.subr.bf16.mxu0 0
    %518 = vmatpush1.bf16.msra.mxu0 %v389
    %519 = vmatprep.subr.bf16.mxu0 0
    %520 = vmatpush1.bf16.msra.mxu0 %v390
    %521 = vmatprep.subr.bf16.mxu0 0
    %522 = vmatpush1.bf16.msra.mxu0 %v391
    %523 = vmatprep.subr.bf16.mxu0 0
    %524 = vmatpush1.bf16.msra.mxu0 %v392
    %525 = vmatprep.subr.bf16.mxu0 0
    %526 = vmatpush1.bf16.msra.mxu0 %v393
    %527 = vmatprep.subr.bf16.mxu0 0
    %528 = vmatpush1.bf16.msra.mxu0 %v394
    %529 = vmatprep.subr.bf16.mxu0 0
    %530 = vmatpush1.bf16.msra.mxu0 %v395
    %531 = vmatprep.subr.bf16.mxu0 0
    %532 = vmatpush1.bf16.msra.mxu0 %v396
    %533 = vmatprep.subr.bf16.mxu0 0
    %534 = vmatpush1.bf16.msra.mxu0 %v397
    %535 = vmatprep.subr.bf16.mxu0 0
    %536 = vmatpush1.bf16.msra.mxu0 %v398
    %537 = vmatprep.subr.bf16.mxu0 0
    %538 = vmatpush1.bf16.msra.mxu0 %v399
    %539 = vmatprep.subr.bf16.mxu0 0
    %540 = vmatpush1.bf16.msra.mxu0 %v400
    %541 = vmatprep.subr.bf16.mxu0 0
    %542 = vmatpush1.bf16.msra.mxu0 %v401
    %543 = vmatprep.subr.bf16.mxu0 0
    %544 = vmatpush1.bf16.msra.mxu0 %v402
    %545 = vmatprep.subr.bf16.mxu0 0
    %546 = vmatpush1.bf16.msra.mxu0 %v403
    %547 = vmatprep.mubr.bf16.mxu0 %v67
    %548 = vmatmul.mubr.bf16.gmra.mrb[0].mxu0 %v66
    %v549 = vpop.f32.mrb[0].mxu0
    %v550 = vadd.f32 %v509, %v549
    %v551 = vpop.f32.mrb[0].mxu0
    %v552 = vpop.f32.mrb[0].mxu0
    %v553 = vadd.f32 %v512, %v552
    %v554 = vpop.f32.mrb[0].mxu0
    %555 = vdwg.mxu0
    %556 = vmatprep.subr.bf16.mxu0 0
    %557 = vmatpush1.bf16.msra.mxu0 %v404
    %558 = vmatprep.subr.bf16.mxu0 0
    %559 = vmatpush1.bf16.msra.mxu0 %v405
    %560 = vmatprep.subr.bf16.mxu0 0
    %561 = vmatpush1.bf16.msra.mxu0 %v406
    %562 = vmatprep.subr.bf16.mxu0 0
    %563 = vmatpush1.bf16.msra.mxu0 %v407
    %564 = vmatprep.subr.bf16.mxu0 0
    %565 = vmatpush1.bf16.msra.mxu0 %v408
    %566 = vmatprep.subr.bf16.mxu0 0
    %567 = vmatpush1.bf16.msra.mxu0 %v409
    %568 = vmatprep.subr.bf16.mxu0 0
    %569 = vmatpush1.bf16.msra.mxu0 %v410
    %570 = vmatprep.subr.bf16.mxu0 0
    %571 = vmatpush1.bf16.msra.mxu0 %v411
    %572 = vmatprep.subr.bf16.mxu0 0
    %573 = vmatpush1.bf16.msra.mxu0 %v412
    %574 = vmatprep.subr.bf16.mxu0 0
    %575 = vmatpush1.bf16.msra.mxu0 %v413
    %576 = vmatprep.subr.bf16.mxu0 0
    %577 = vmatpush1.bf16.msra.mxu0 %v414
    %578 = vmatprep.subr.bf16.mxu0 0
    %579 = vmatpush1.bf16.msra.mxu0 %v415
    %580 = vmatprep.subr.bf16.mxu0 0
    %581 = vmatpush1.bf16.msra.mxu0 %v416
    %582 = vmatprep.subr.bf16.mxu0 0
    %583 = vmatpush1.bf16.msra.mxu0 %v417
    %584 = vmatprep.subr.bf16.mxu0 0
    %585 = vmatpush1.bf16.msra.mxu0 %v418
    %586 = vmatprep.subr.bf16.mxu0 0
    %587 = vmatpush1.bf16.msra.mxu0 %v419
    %588 = vmatprep.mubr.bf16.mxu0 %v69
    %589 = vmatmul.mubr.bf16.gmra.mrb[0].mxu0 %v68
    %v590 = vpop.f32.mrb[0].mxu0
    %v591 = vadd.f32 %v550, %v590
    %v592 = vpop.f32.mrb[0].mxu0
    %v593 = vpop.f32.mrb[0].mxu0
    %v594 = vadd.f32 %v553, %v593
    %v595 = vpop.f32.mrb[0].mxu0
    %596 = vdwg.mxu0
    %597 = vmatprep.subr.bf16.mxu0 0
    %598 = vmatpush1.bf16.msra.mxu0 %v420
    %599 = vmatprep.subr.bf16.mxu0 0
    %600 = vmatpush1.bf16.msra.mxu0 0
    %601 = vmatprep.subr.bf16.mxu0 0
    %602 = vmatpush1.bf16.msra.mxu0 0
    %603 = vmatprep.subr.bf16.mxu0 0
    %604 = vmatpush1.bf16.msra.mxu0 0
    %605 = vmatprep.subr.bf16.mxu0 0
    %606 = vmatpush1.bf16.msra.mxu0 0
    %607 = vmatprep.subr.bf16.mxu0 0
    %608 = vmatpush1.bf16.msra.mxu0 0
    %609 = vmatprep.subr.bf16.mxu0 0
    %610 = vmatpush1.bf16.msra.mxu0 0
    %611 = vmatprep.subr.bf16.mxu0 0
    %612 = vmatpush1.bf16.msra.mxu0 0
    %613 = vmatprep.subr.bf16.mxu0 0
    %614 = vmatpush1.bf16.msra.mxu0 0
    %615 = vmatprep.subr.bf16.mxu0 0
    %616 = vmatpush1.bf16.msra.mxu0 0
    %617 = vmatprep.subr.bf16.mxu0 0
    %618 = vmatpush1.bf16.msra.mxu0 0
    %619 = vmatprep.subr.bf16.mxu0 0
    %620 = vmatpush1.bf16.msra.mxu0 0
    %621 = vmatprep.subr.bf16.mxu0 0
    %622 = vmatpush1.bf16.msra.mxu0 0
    %623 = vmatprep.subr.bf16.mxu0 0
    %624 = vmatpush1.bf16.msra.mxu0 0
    %625 = vmatprep.subr.bf16.mxu0 0
    %626 = vmatpush1.bf16.msra.mxu0 0
    %627 = vmatprep.subr.bf16.mxu0 0
    %628 = vmatpush1.bf16.msra.mxu0 0
    %629 = vmatprep.mubr.bf16.mxu0 0
    %630 = vmatmul.mubr.bf16.gmra.mrb[0].mxu0 %v472
    %v631 = vpop.f32.mrb[0].mxu0
    %v632 = vadd.f32 %v591, %v631
    %v633 = vpop.f32.mrb[0].mxu0
    %v634 = vpop.f32.mrb[0].mxu0
    %v635 = vadd.f32 %v594, %v634
    %v636 = vpop.f32.mrb[0].mxu0
    %637 = vdwg.mxu0
    %v638 = vmax.f32 %v632, 0.0
    %v639 = vmax.f32 %v635, 0.0
    %v640 = vpack.c.bf16 %v639, %v638
    %v641 = vld [vmem:[%s3] sm:$0xf]
    %v642 = vld [vmem:[%s3 + $0x4] sm:$0xf]
    %v643 = vld [vmem:[%s3 + $0x8] sm:$0xf]
    %v644 = vld [vmem:[%s3 + $0xc] sm:$0xf]
    %v645 = vld [vmem:[%s3 + $0x10] sm:$0xf]
    %v646 = vld [vmem:[%s3 + $0x14] sm:$0xf]
    %v647 = vld [vmem:[%s3 + $0x18] sm:$0xf]
    %v648 = vld [vmem:[%s3 + $0x1c] sm:$0xf]
    %v649 = vld [vmem:[%s3 + $0x20] sm:$0xf]
    %v650 = vld [vmem:[%s3 + $0x24] sm:$0xf]
    %v651 = vld [vmem:[%s3 + $0x28] sm:$0xf]
    %v652 = vld [vmem:[%s3 + $0x2c] sm:$0xf]
    %v653 = vld [vmem:[%s3 + $0x30] sm:$0xf]
    %v654 = vld [vmem:[%s3 + $0x34] sm:$0xf]
    %v655 = vld [vmem:[%s3 + $0x38] sm:$0xf]
    %v656 = vld [vmem:[%s3 + $0x3c] sm:$0xf]
    %v657 = vld [vmem:[%s4] sm:$0x1]
    %v659 = vlaneseq
    %v660 = vshrl.u32 %v659, 7
    %v661 = vsub.s32 0, %v660
    %v662 = vrot.slane %v657, %v661
    %v680 = vunpack.c.l.b16 %v641
    %v681 = vunpack.c.l.b16 %v642
    %v682 = vunpack.c.l.b16 %v643
    %v683 = vunpack.c.l.b16 %v644
    %v684 = vunpack.c.l.b16 %v645
    %v685 = vunpack.c.l.b16 %v646
    %v686 = vunpack.c.l.b16 %v647
    %v687 = vunpack.c.l.b16 %v648
    %v688 = vunpack.c.l.b16 %v649
    %v689 = vunpack.c.l.b16 %v650
    %v690 = vunpack.c.l.b16 %v651
    %v691 = vunpack.c.l.b16 %v652
    %v692 = vunpack.c.l.b16 %v653
    %v693 = vunpack.c.l.b16 %v654
    %v694 = vunpack.c.l.b16 %v655
    %v695 = vunpack.c.l.b16 %v656
    %v696 = vpack.c.b16 %v681, %v680
    %v697 = vpack.c.b16 %v683, %v682
    %v698 = vpack.c.b16 %v685, %v684
    %v699 = vpack.c.b16 %v687, %v686
    %v700 = vpack.c.b16 %v689, %v688
    %v701 = vpack.c.b16 %v691, %v690
    %v702 = vpack.c.b16 %v693, %v692
    %v703 = vpack.c.b16 %v695, %v694
    %712 = vmatprep.subr.bf16.mxu0 0
    %713 = vmatpush1.bf16.msra.mxu0 %v696
    %714 = vmatprep.subr.bf16.mxu0 0
    %715 = vmatpush1.bf16.msra.mxu0 %v697
    %716 = vmatprep.subr.bf16.mxu0 0
    %717 = vmatpush1.bf16.msra.mxu0 %v698
    %718 = vmatprep.subr.bf16.mxu0 0
    %719 = vmatpush1.bf16.msra.mxu0 %v699
    %720 = vmatprep.subr.bf16.mxu0 0
    %721 = vmatpush1.bf16.msra.mxu0 %v700
    %722 = vmatprep.subr.bf16.mxu0 0
    %723 = vmatpush1.bf16.msra.mxu0 %v701
    %724 = vmatprep.subr.bf16.mxu0 0
    %725 = vmatpush1.bf16.msra.mxu0 %v702
    %726 = vmatprep.subr.bf16.mxu0 0
    %727 = vmatpush1.bf16.msra.mxu0 %v703
    %728 = vmatprep.subr.bf16.mxu0 0
    %729 = vmatpush1.bf16.msra.mxu0 0
    %730 = vmatprep.subr.bf16.mxu0 0
    %731 = vmatpush1.bf16.msra.mxu0 0
    %732 = vmatprep.subr.bf16.mxu0 0
    %733 = vmatpush1.bf16.msra.mxu0 0
    %734 = vmatprep.subr.bf16.mxu0 0
    %735 = vmatpush1.bf16.msra.mxu0 0
    %736 = vmatprep.subr.bf16.mxu0 0
    %737 = vmatpush1.bf16.msra.mxu0 0
    %738 = vmatprep.subr.bf16.mxu0 0
    %739 = vmatpush1.bf16.msra.mxu0 0
    %740 = vmatprep.subr.bf16.mxu0 0
    %741 = vmatpush1.bf16.msra.mxu0 0
    %742 = vmatprep.subr.bf16.mxu0 0
    %743 = vmatpush1.bf16.msra.mxu0 0
    %744 = vmatprep.mubr.bf16.mxu0 0
    %745 = vmatmul.mubr.bf16.gmra.mrb[0].mxu0 %v640
    %v746 = vpop.f32.mrb[0].mxu0
    %v747 = vadd.f32 %v662, %v746
    %v748 = vpop.f32.mrb[0].mxu0
    %v749 = vpop.f32.mrb[0].mxu0
    %v750 = vadd.f32 %v662, %v749
    %v751 = vpop.f32.mrb[0].mxu0
    %752 = vdwg.mxu0
    %vm753 = vcmask 80896
    %754 = vst.msk [vmem:[#allocation7] sm:$0xff] %vm753, %v747
    %755 = vst.msk [vmem:[#allocation7 + $0x8] sm:$0xff] %vm753, %v750
    // Predicated region
    $region30: #{tpu_custom_call.1} parent=1 // pred_check
      _
    $region31: #{tpu_custom_call.1} parent=1 // pred_check_branch
      %757 = sbr.rel (0) target = $region33
    $region32: #{tpu_custom_call.1} parent=1 // pred_region
      %s759 = ssub.s32 256, 256
      %760 = vsyncadd [#allocation4], %s759
      %s761 = sshll.u32 [#allocation7], 4
      %s762 = int_to_ptr.vmem [resolvable:$true] %s761
      %767 = dma.vmem_to_hbm [thread:$0]  %s762, 256, %s5, [#allocation4], 128, 128, 8
    $region33: #{tpu_custom_call.1} parent=1 // pred_fallthru
      _
    // Predicated region
    $region34: #{tpu_custom_call.1} parent=1 // pred_check
      _
    $region35: #{tpu_custom_call.1} parent=1 // pred_check_branch
      %769 = sbr.rel (0) target = $region37
    $region36: #{tpu_custom_call.1} parent=1 // pred_region
      %770 = dma.done [#allocation4], 256
    $region37: #{tpu_custom_call.1} parent=1 // pred_fallthru
      _
    %771 = vsyncpa [#allocation3], 1
    %772 = vsyncpa [#allocation6], 1
    %773 = vsyncpa [#allocation4], 1

</llo_original>
